<compile_context>
chip_gen: v5e
topology: v5e:2x2
jax: 0.10.0
libtpu: 0.0.40
codegen_flags: <defaults>
</compile_context>

<pallas_src>
import functools

import jax
import jax.numpy as jnp
from jax import lax
from jax.experimental import pallas as pl
from jax.experimental.pallas import tpu as pltpu


# ----------------------------------------------------------------------------
# Fused kernel: one grid step == one batch BLOCK of `batch_block` elements.
#   x_ref    : (BB, N, D)       activation block
#   wqkv_ref : (D, 3*inner)     bf16, pre-transposed, Q-columns pre-scaled
#   wout_ref : (inner, D)       bf16, pre-transposed
#   bout_ref : (1, D)           f32 output bias
#   o_ref    : (BB, N, D)       output block
#   oh_ref   : (BB*N, inner)    f32 VMEM scratch holding all heads' outputs
# ----------------------------------------------------------------------------
def _cat_attention_kernel(x_ref, wqkv_ref, wout_ref, bout_ref, o_ref, oh_ref,
                          *, batch_block, heads, dim_head):
    BB = batch_block
    N = x_ref.shape[1]
    D = x_ref.shape[2]
    inner = heads * dim_head

    # Flatten the batch block so the two projections are single MXU matmuls.
    x = x_ref[...].reshape(BB * N, D).astype(jnp.bfloat16)          # (BB*N, D)

    # QKV projection.  Softmax scale is already folded into the Q columns.
    qkv = jnp.dot(x, wqkv_ref[...],
                  preferred_element_type=jnp.float32)               # (BB*N, 3*inner) f32
    qkv_bf = qkv.astype(jnp.bfloat16)                                # MXU operand dtype

    # Per-(batch, head) attention, statically unrolled (BB, heads are small
    # Python ints).  Each head's output is stacked along lanes into oh_ref.
    for b in range(BB):
        r0 = b * N
        for h in range(heads):
            lo = h * dim_head
            hi = lo + dim_head
            qh = qkv_bf[r0:r0 + N, lo:hi]                            # (N, Dh)
            kh = qkv_bf[r0:r0 + N, inner + lo:inner + hi]            # (N, Dh)
            vh = qkv_bf[r0:r0 + N, 2 * inner + lo:2 * inner + hi]    # (N, Dh)

            # q k^T via transposed contraction (no explicit transpose).
            dots = lax.dot_general(
                qh, kh, (((1,), (1,)), ((), ())),
                preferred_element_type=jnp.float32)                  # (N, N) f32
            dots = dots - jnp.max(dots, axis=-1, keepdims=True)
            p = jnp.exp(dots)
            p = p * pl.reciprocal(jnp.sum(p, axis=-1, keepdims=True),
                                  approx=True)

            oh = jnp.dot(p.astype(jnp.bfloat16), vh,
                         preferred_element_type=jnp.float32)         # (N, Dh) f32
            oh_ref[r0:r0 + N, lo:hi] = oh

    # Single fused output projection + bias for the whole batch block:
    # (BB*N, inner) @ (inner, D).
    y = jnp.dot(oh_ref[...].astype(jnp.bfloat16), wout_ref[...],
                preferred_element_type=jnp.float32) + bout_ref[...]
    o_ref[...] = y.reshape(BB, N, D).astype(o_ref.dtype)


def cat_attention_forward(x, kparams, heads, dim_head, num_blocks=None):
    """x: (B, N, D) -> (B, N, D).  Single fused pallas_call over batch blocks."""
    B, N, D = x.shape
    inner = heads * dim_head

    if num_blocks is None:
        # 2-wide "parallel" axis so both v7x TensorCores get work; use
        # num_blocks=1 to fully collapse the grid on v5e/v6e (1 TC per chip).
        num_blocks = 2 if (B >= 2 and B % 2 == 0) else 1
    assert B % num_blocks == 0, "num_blocks must divide the batch"
    BB = B // num_blocks

    kernel = functools.partial(
        _cat_attention_kernel, batch_block=BB, heads=heads, dim_head=dim_head)

    return pl.pallas_call(
        kernel,
        out_shape=jax.ShapeDtypeStruct((B, N, D), x.dtype),
        grid=(num_blocks,),
        in_specs=[
            pl.BlockSpec((BB, N, D), lambda i: (i, 0, 0)),        # x block
            pl.BlockSpec((D, 3 * inner), lambda i: (0, 0)),       # Wqkv^T (resident)
            pl.BlockSpec((inner, D), lambda i: (0, 0)),           # Wout^T (resident)
            pl.BlockSpec((1, D), lambda i: (0, 0)),               # bias   (resident)
        ],
        out_specs=pl.BlockSpec((BB, N, D), lambda i: (i, 0, 0)),
        scratch_shapes=[pltpu.VMEM((BB * N, inner), jnp.float32)],
        compiler_params=pltpu.CompilerParams(
            dimension_semantics=("parallel",)),
    )(x, kparams["w_qkv_t"], kparams["w_out_t"], kparams["b_out"])


# ----------------------------------------------------------------------------
# Parameters.
#   init_params         : raw PyTorch-layout f32 params (nn.Linear default init)
#   prepare_kernel_params: one-time transform -> pre-transposed bf16 weights
#                          with the softmax scale folded into the Q columns.
# ----------------------------------------------------------------------------
def init_params(key, dim, heads, dim_head):
    inner = heads * dim_head
    k1, k2, k3 = jax.random.split(key, 3)
    bound_qkv = 1.0 / (dim ** 0.5)
    bound_out = 1.0 / (inner ** 0.5)
    w_qkv = jax.random.uniform(
        k1, (inner * 3, dim), jnp.float32, -bound_qkv, bound_qkv)
    w_out = jax.random.uniform(
        k2, (dim, inner), jnp.float32, -bound_out, bound_out)
    b_out = jax.random.uniform(
        k3, (dim,), jnp.float32, -bound_out, bound_out)
    return {"w_qkv": w_qkv, "w_out": w_out, "b_out": b_out}


def prepare_kernel_params(raw, heads, dim_head):
    inner = heads * dim_head
    scale = dim_head ** -0.5
    w_qkv_t = raw["w_qkv"].T                       # (dim, 3*inner)
    w_qkv_t = w_qkv_t.at[:, :inner].multiply(scale)  # fold scale into Q columns
    return {
        "w_qkv_t": w_qkv_t.astype(jnp.bfloat16),        # (dim, 3*inner) bf16
        "w_out_t": raw["w_out"].T.astype(jnp.bfloat16),  # (inner, dim)   bf16
        "b_out": raw["b_out"].reshape(1, -1).astype(jnp.float32),  # (1, dim) f32
    }


# Pure-JAX f32 reference (mirrors the PyTorch module) for a correctness check.
def reference_forward(x, raw, heads, dim_head):
    B, N, D = x.shape
    inner = heads * dim_head
    scale = dim_head ** -0.5
    qkv = x @ raw["w_qkv"].T                           # (B, N, 3*inner)
    q, k, v = jnp.split(qkv, 3, axis=-1)

    def to_heads(t):
        return t.reshape(B, N, heads, dim_head).transpose(0, 2, 1, 3)

    q, k, v = map(to_heads, (q, k, v))                 # (B, H, N, Dh)
    dots = jnp.einsum("bhqd,bhkd->bhqk", q, k) * scale
    attn = jax.nn.softmax(dots, axis=-1)
    out = jnp.einsum("bhqk,bhkd->bhqd", attn, v)
    out = out.transpose(0, 2, 1, 3).reshape(B, N, inner)
    return out @ raw["w_out"].T + raw["b_out"]


if __name__ == "__main__":
    # Small shapes consistent with the module (inner_dim != dim -> project_out).
    B, N, DIM = 2, 8, 32
    HEADS, DIM_HEAD = 4, 16

    key = jax.random.PRNGKey(0)
    kx, kp = jax.random.split(key)
    x = jax.random.normal(kx, (B, N, DIM), dtype=jnp.float32)

    raw_params = init_params(kp, DIM, HEADS, DIM_HEAD)
    kparams = prepare_kernel_params(raw_params, HEADS, DIM_HEAD)

    fwd = jax.jit(functools.partial(
        cat_attention_forward, heads=HEADS, dim_head=DIM_HEAD))
    y = fwd(x, kparams)
    jax.block_until_ready(y)
    assert y.shape == (B, N, DIM)

    # Correctness vs the f32 reference (kernel uses bf16 MXU operands, so a
    # slightly relaxed tolerance is expected and accepted per review).
    y_ref = reference_forward(x, raw_params, HEADS, DIM_HEAD)
    max_err = float(jnp.max(jnp.abs(y - y_ref)))
    assert jnp.allclose(y, y_ref, atol=3e-2, rtol=3e-2), max_err

    print("KERNEL_OK")
</pallas_src>

<mosaic_0001>
module attributes {stable_mosaic.version = 11 : i64} {
  func.func @_cat_attention_kernel(%arg0: i32, %arg1: memref<1x8x32xf32, #tpu.memory_space<vmem>>, %arg2: memref<32x192xbf16, #tpu.memory_space<vmem>>, %arg3: memref<64x32xbf16, #tpu.memory_space<vmem>>, %arg4: memref<1x32xf32, #tpu.memory_space<vmem>>, %arg5: memref<1x8x32xf32, #tpu.memory_space<vmem>>, %arg6: memref<8x64xf32, #tpu.memory_space<vmem>>) attributes {dimension_semantics = [#tpu.dimension_semantics<parallel>], iteration_bounds = array<i64: 2>, scalar_prefetch = 0 : i64, scratch_operands = 1 : i64, tpu.core_type = #tpu.core_type<tc>, window_params = [{transform_indices = @transform_0, window_bounds = array<i64: 1, 8, 32>}, {pipeline_mode = #tpu.pipeline_mode<synchronous>, transform_indices = @transform_1, window_bounds = array<i64: 32, 192>}, {pipeline_mode = #tpu.pipeline_mode<synchronous>, transform_indices = @transform_2, window_bounds = array<i64: 64, 32>}, {pipeline_mode = #tpu.pipeline_mode<synchronous>, transform_indices = @transform_3, window_bounds = array<i64: 1, 32>}, {transform_indices = @transform_4, window_bounds = array<i64: 1, 8, 32>}]} {
    %c0 = arith.constant 0 : index
    %c0_0 = arith.constant 0 : index
    %c0_1 = arith.constant 0 : index
    %0 = vector.load %arg1[%c0, %c0_0, %c0_1] : memref<1x8x32xf32, #tpu.memory_space<vmem>>, vector<1x8x32xf32>
    %1 = vector.shape_cast %0 : vector<1x8x32xf32> to vector<8x32xf32>
    %2 = arith.truncf %1 : vector<8x32xf32> to vector<8x32xbf16>
    %c0_2 = arith.constant 0 : index
    %c0_3 = arith.constant 0 : index
    %3 = vector.load %arg2[%c0_2, %c0_3] : memref<32x192xbf16, #tpu.memory_space<vmem>>, vector<32x192xbf16>
    %cst = arith.constant dense<0.000000e+00> : vector<8x192xf32>
    %4 = tpu.matmul %2, %3, %cst {dimension_numbers = #tpu.dot_dimension_numbers<[1], [0], [0], [1], [0, 0, 1, 1], [], []>} : vector<8x32xbf16>, vector<32x192xbf16>, vector<8x192xf32> -> vector<8x192xf32>
    %5 = arith.truncf %4 : vector<8x192xf32> to vector<8x192xbf16>
    %6 = vector.extract_strided_slice %5 {offsets = [0, 0], sizes = [8, 16], strides = [1, 1]} : vector<8x192xbf16> to vector<8x16xbf16>
    %7 = vector.extract_strided_slice %5 {offsets = [0, 64], sizes = [8, 16], strides = [1, 1]} : vector<8x192xbf16> to vector<8x16xbf16>
    %8 = vector.extract_strided_slice %5 {offsets = [0, 128], sizes = [8, 16], strides = [1, 1]} : vector<8x192xbf16> to vector<8x16xbf16>
    %cst_4 = arith.constant dense<0.000000e+00> : vector<8x8xf32>
    %9 = tpu.matmul %6, %7, %cst_4 {dimension_numbers = #tpu.dot_dimension_numbers<[1], [1], [0], [0], [0, 0, 1, 0], [], []>} : vector<8x16xbf16>, vector<8x16xbf16>, vector<8x8xf32> -> vector<8x8xf32>
    %cst_5 = arith.constant dense<0xFF800000> : vector<8xf32>
    %10 = vector.multi_reduction <maximumf>, %9, %cst_5 [1] : vector<8x8xf32> to vector<8xf32>
    %11 = vector.shape_cast %10 : vector<8xf32> to vector<8x1xf32>
    %12 = vector.broadcast %11 : vector<8x1xf32> to vector<8x8xf32>
    %13 = arith.subf %9, %12 : vector<8x8xf32>
    %14 = math.exp %13 : vector<8x8xf32>
    %cst_6 = arith.constant dense<0.000000e+00> : vector<8xf32>
    %15 = vector.multi_reduction <add>, %14, %cst_6 [1] : vector<8x8xf32> to vector<8xf32>
    %16 = vector.shape_cast %15 : vector<8xf32> to vector<8x1xf32>
    %17 = tpu.reciprocal %16 {approx = true} : vector<8x1xf32> -> vector<8x1xf32>
    %18 = vector.broadcast %17 : vector<8x1xf32> to vector<8x8xf32>
    %19 = arith.mulf %14, %18 : vector<8x8xf32>
    %20 = arith.truncf %19 : vector<8x8xf32> to vector<8x8xbf16>
    %cst_7 = arith.constant dense<0.000000e+00> : vector<8x16xf32>
    %21 = tpu.matmul %20, %8, %cst_7 {dimension_numbers = #tpu.dot_dimension_numbers<[1], [0], [0], [1], [0, 0, 1, 1], [], []>} : vector<8x8xbf16>, vector<8x16xbf16>, vector<8x16xf32> -> vector<8x16xf32>
    %c0_8 = arith.constant 0 : index
    %c0_9 = arith.constant 0 : index
    %22 = vector.load %arg6[%c0_8, %c0_9] : memref<8x64xf32, #tpu.memory_space<vmem>>, vector<8x16xf32>
    tpu.vector_store %arg6[%c0_8, %c0_9], %21 {strides = array<i32>} : memref<8x64xf32, #tpu.memory_space<vmem>>, vector<8x16xf32>,
    %23 = vector.extract_strided_slice %5 {offsets = [0, 16], sizes = [8, 16], strides = [1, 1]} : vector<8x192xbf16> to vector<8x16xbf16>
    %24 = vector.extract_strided_slice %5 {offsets = [0, 80], sizes = [8, 16], strides = [1, 1]} : vector<8x192xbf16> to vector<8x16xbf16>
    %25 = vector.extract_strided_slice %5 {offsets = [0, 144], sizes = [8, 16], strides = [1, 1]} : vector<8x192xbf16> to vector<8x16xbf16>
    %cst_10 = arith.constant dense<0.000000e+00> : vector<8x8xf32>
    %26 = tpu.matmul %23, %24, %cst_10 {dimension_numbers = #tpu.dot_dimension_numbers<[1], [1], [0], [0], [0, 0, 1, 0], [], []>} : vector<8x16xbf16>, vector<8x16xbf16>, vector<8x8xf32> -> vector<8x8xf32>
    %cst_11 = arith.constant dense<0xFF800000> : vector<8xf32>
    %27 = vector.multi_reduction <maximumf>, %26, %cst_11 [1] : vector<8x8xf32> to vector<8xf32>
    %28 = vector.shape_cast %27 : vector<8xf32> to vector<8x1xf32>
    %29 = vector.broadcast %28 : vector<8x1xf32> to vector<8x8xf32>
    %30 = arith.subf %26, %29 : vector<8x8xf32>
    %31 = math.exp %30 : vector<8x8xf32>
    %cst_12 = arith.constant dense<0.000000e+00> : vector<8xf32>
    %32 = vector.multi_reduction <add>, %31, %cst_12 [1] : vector<8x8xf32> to vector<8xf32>
    %33 = vector.shape_cast %32 : vector<8xf32> to vector<8x1xf32>
    %34 = tpu.reciprocal %33 {approx = true} : vector<8x1xf32> -> vector<8x1xf32>
    %35 = vector.broadcast %34 : vector<8x1xf32> to vector<8x8xf32>
    %36 = arith.mulf %31, %35 : vector<8x8xf32>
    %37 = arith.truncf %36 : vector<8x8xf32> to vector<8x8xbf16>
    %cst_13 = arith.constant dense<0.000000e+00> : vector<8x16xf32>
    %38 = tpu.matmul %37, %25, %cst_13 {dimension_numbers = #tpu.dot_dimension_numbers<[1], [0], [0], [1], [0, 0, 1, 1], [], []>} : vector<8x8xbf16>, vector<8x16xbf16>, vector<8x16xf32> -> vector<8x16xf32>
    %c0_14 = arith.constant 0 : index
    %c16 = arith.constant 16 : index
    %39 = vector.load %arg6[%c0_14, %c16] : memref<8x64xf32, #tpu.memory_space<vmem>>, vector<8x16xf32>
    tpu.vector_store %arg6[%c0_14, %c16], %38 {strides = array<i32>} : memref<8x64xf32, #tpu.memory_space<vmem>>, vector<8x16xf32>,
    %40 = vector.extract_strided_slice %5 {offsets = [0, 32], sizes = [8, 16], strides = [1, 1]} : vector<8x192xbf16> to vector<8x16xbf16>
    %41 = vector.extract_strided_slice %5 {offsets = [0, 96], sizes = [8, 16], strides = [1, 1]} : vector<8x192xbf16> to vector<8x16xbf16>
    %42 = vector.extract_strided_slice %5 {offsets = [0, 160], sizes = [8, 16], strides = [1, 1]} : vector<8x192xbf16> to vector<8x16xbf16>
    %cst_15 = arith.constant dense<0.000000e+00> : vector<8x8xf32>
    %43 = tpu.matmul %40, %41, %cst_15 {dimension_numbers = #tpu.dot_dimension_numbers<[1], [1], [0], [0], [0, 0, 1, 0], [], []>} : vector<8x16xbf16>, vector<8x16xbf16>, vector<8x8xf32> -> vector<8x8xf32>
    %cst_16 = arith.constant dense<0xFF800000> : vector<8xf32>
    %44 = vector.multi_reduction <maximumf>, %43, %cst_16 [1] : vector<8x8xf32> to vector<8xf32>
    %45 = vector.shape_cast %44 : vector<8xf32> to vector<8x1xf32>
    %46 = vector.broadcast %45 : vector<8x1xf32> to vector<8x8xf32>
    %47 = arith.subf %43, %46 : vector<8x8xf32>
    %48 = math.exp %47 : vector<8x8xf32>
    %cst_17 = arith.constant dense<0.000000e+00> : vector<8xf32>
    %49 = vector.multi_reduction <add>, %48, %cst_17 [1] : vector<8x8xf32> to vector<8xf32>
    %50 = vector.shape_cast %49 : vector<8xf32> to vector<8x1xf32>
    %51 = tpu.reciprocal %50 {approx = true} : vector<8x1xf32> -> vector<8x1xf32>
    %52 = vector.broadcast %51 : vector<8x1xf32> to vector<8x8xf32>
    %53 = arith.mulf %48, %52 : vector<8x8xf32>
    %54 = arith.truncf %53 : vector<8x8xf32> to vector<8x8xbf16>
    %cst_18 = arith.constant dense<0.000000e+00> : vector<8x16xf32>
    %55 = tpu.matmul %54, %42, %cst_18 {dimension_numbers = #tpu.dot_dimension_numbers<[1], [0], [0], [1], [0, 0, 1, 1], [], []>} : vector<8x8xbf16>, vector<8x16xbf16>, vector<8x16xf32> -> vector<8x16xf32>
    %c0_19 = arith.constant 0 : index
    %c32 = arith.constant 32 : index
    %56 = vector.load %arg6[%c0_19, %c32] : memref<8x64xf32, #tpu.memory_space<vmem>>, vector<8x16xf32>
    tpu.vector_store %arg6[%c0_19, %c32], %55 {strides = array<i32>} : memref<8x64xf32, #tpu.memory_space<vmem>>, vector<8x16xf32>,
    %57 = vector.extract_strided_slice %5 {offsets = [0, 48], sizes = [8, 16], strides = [1, 1]} : vector<8x192xbf16> to vector<8x16xbf16>
    %58 = vector.extract_strided_slice %5 {offsets = [0, 112], sizes = [8, 16], strides = [1, 1]} : vector<8x192xbf16> to vector<8x16xbf16>
    %59 = vector.extract_strided_slice %5 {offsets = [0, 176], sizes = [8, 16], strides = [1, 1]} : vector<8x192xbf16> to vector<8x16xbf16>
    %cst_20 = arith.constant dense<0.000000e+00> : vector<8x8xf32>
    %60 = tpu.matmul %57, %58, %cst_20 {dimension_numbers = #tpu.dot_dimension_numbers<[1], [1], [0], [0], [0, 0, 1, 0], [], []>} : vector<8x16xbf16>, vector<8x16xbf16>, vector<8x8xf32> -> vector<8x8xf32>
    %cst_21 = arith.constant dense<0xFF800000> : vector<8xf32>
    %61 = vector.multi_reduction <maximumf>, %60, %cst_21 [1] : vector<8x8xf32> to vector<8xf32>
    %62 = vector.shape_cast %61 : vector<8xf32> to vector<8x1xf32>
    %63 = vector.broadcast %62 : vector<8x1xf32> to vector<8x8xf32>
    %64 = arith.subf %60, %63 : vector<8x8xf32>
    %65 = math.exp %64 : vector<8x8xf32>
    %cst_22 = arith.constant dense<0.000000e+00> : vector<8xf32>
    %66 = vector.multi_reduction <add>, %65, %cst_22 [1] : vector<8x8xf32> to vector<8xf32>
    %67 = vector.shape_cast %66 : vector<8xf32> to vector<8x1xf32>
    %68 = tpu.reciprocal %67 {approx = true} : vector<8x1xf32> -> vector<8x1xf32>
    %69 = vector.broadcast %68 : vector<8x1xf32> to vector<8x8xf32>
    %70 = arith.mulf %65, %69 : vector<8x8xf32>
    %71 = arith.truncf %70 : vector<8x8xf32> to vector<8x8xbf16>
    %cst_23 = arith.constant dense<0.000000e+00> : vector<8x16xf32>
    %72 = tpu.matmul %71, %59, %cst_23 {dimension_numbers = #tpu.dot_dimension_numbers<[1], [0], [0], [1], [0, 0, 1, 1], [], []>} : vector<8x8xbf16>, vector<8x16xbf16>, vector<8x16xf32> -> vector<8x16xf32>
    %c0_24 = arith.constant 0 : index
    %c48 = arith.constant 48 : index
    %73 = vector.load %arg6[%c0_24, %c48] : memref<8x64xf32, #tpu.memory_space<vmem>>, vector<8x16xf32>
    tpu.vector_store %arg6[%c0_24, %c48], %72 {strides = array<i32>} : memref<8x64xf32, #tpu.memory_space<vmem>>, vector<8x16xf32>,
    %c0_25 = arith.constant 0 : index
    %c0_26 = arith.constant 0 : index
    %74 = vector.load %arg6[%c0_25, %c0_26] : memref<8x64xf32, #tpu.memory_space<vmem>>, vector<8x64xf32>
    %75 = arith.truncf %74 : vector<8x64xf32> to vector<8x64xbf16>
    %c0_27 = arith.constant 0 : index
    %c0_28 = arith.constant 0 : index
    %76 = vector.load %arg3[%c0_27, %c0_28] : memref<64x32xbf16, #tpu.memory_space<vmem>>, vector<64x32xbf16>
    %cst_29 = arith.constant dense<0.000000e+00> : vector<8x32xf32>
    %77 = tpu.matmul %75, %76, %cst_29 {dimension_numbers = #tpu.dot_dimension_numbers<[1], [0], [0], [1], [0, 0, 1, 1], [], []>} : vector<8x64xbf16>, vector<64x32xbf16>, vector<8x32xf32> -> vector<8x32xf32>
    %c0_30 = arith.constant 0 : index
    %c0_31 = arith.constant 0 : index
    %78 = vector.load %arg4[%c0_30, %c0_31] : memref<1x32xf32, #tpu.memory_space<vmem>>, vector<1x32xf32>
    %79 = vector.broadcast %78 : vector<1x32xf32> to vector<8x32xf32>
    %80 = arith.addf %77, %79 : vector<8x32xf32>
    %81 = vector.shape_cast %80 : vector<8x32xf32> to vector<1x8x32xf32>
    %c0_32 = arith.constant 0 : index
    %c0_33 = arith.constant 0 : index
    %c0_34 = arith.constant 0 : index
    %82 = vector.load %arg5[%c0_32, %c0_33, %c0_34] : memref<1x8x32xf32, #tpu.memory_space<vmem>>, vector<1x8x32xf32>
    tpu.vector_store %arg5[%c0_32, %c0_33, %c0_34], %81 {strides = array<i32>} : memref<1x8x32xf32, #tpu.memory_space<vmem>>, vector<1x8x32xf32>,
    return
  }
  func.func @transform_0(%arg0: i32) -> (i32, i32, i32) {
    %c0_i32 = arith.constant 0 : i32
    %c0_i32_0 = arith.constant 0 : i32
    %c0_i32_1 = arith.constant 0 : i32
    return %arg0, %c0_i32, %c0_i32_0 : i32, i32, i32
  }
  func.func @transform_1(%arg0: i32) -> (i32, i32) {
    %c0_i32 = arith.constant 0 : i32
    %c0_i32_0 = arith.constant 0 : i32
    %c0_i32_1 = arith.constant 0 : i32
    return %c0_i32, %c0_i32_0 : i32, i32
  }
  func.func @transform_2(%arg0: i32) -> (i32, i32) {
    %c0_i32 = arith.constant 0 : i32
    %c0_i32_0 = arith.constant 0 : i32
    %c0_i32_1 = arith.constant 0 : i32
    return %c0_i32, %c0_i32_0 : i32, i32
  }
  func.func @transform_3(%arg0: i32) -> (i32, i32) {
    %c0_i32 = arith.constant 0 : i32
    %c0_i32_0 = arith.constant 0 : i32
    %c0_i32_1 = arith.constant 0 : i32
    return %c0_i32, %c0_i32_0 : i32, i32
  }
  func.func @transform_4(%arg0: i32) -> (i32, i32, i32) {
    %c0_i32 = arith.constant 0 : i32
    %c0_i32_0 = arith.constant 0 : i32
    %c0_i32_1 = arith.constant 0 : i32
    return %arg0, %c0_i32, %c0_i32_0 : i32, i32, i32
  }
}

</mosaic_0001>

<llo_original>
// kernel: cat_attention_forward.1
$region0: #{cat_attention_forward.1}
  #allocation0 [shape = 'u32[]', space=smem, size = 0x4, offset = 0x4, fixed_abs, tag = 'smem constant byte address 0x4 - core index']
  #allocation1 [shape = 'u32[72,128]{1,0:T(1,128)}', space=vmem, size = 0x9000, scoped, tag = 'internal scratch']
  #allocation2 [shape = 'f32[8,64]{1,0:T(8,128)}', space=vmem, size = 0x1000, scoped, tag = 'scratch operand']
  %s0 = inlined_call_operand.vmem [shape: f32[2,8,32], index: 0, kind: input, shape index: {}]
  %s1 = inlined_call_operand.vmem [shape: bf16[32,192], index: 1, kind: input, shape index: {}]
  %s2 = inlined_call_operand.vmem [shape: bf16[64,32], index: 2, kind: input, shape index: {}]
  %s3 = inlined_call_operand.vmem [shape: f32[1,32], index: 3, kind: input, shape index: {}]
  %s4 = inlined_call_operand.hbm [shape: f32[2,8,32], index: 4, kind: output, shape index: {}]
  %s5 = sld [smem:[#allocation0]]
  $region49: #{cat_attention_forward.1} parent=0
    _
  %s7 = ssub.s32 1, %s5
  %s8 = scalar_select 0, %s7, %s5
  $region1: #{cat_attention_forward.1} parent=0
    #allocation3 [shape = 'u8[8192]{0}', space=vmem, size = 0x2000, scoped, tag = 'output window, operand 0']
    #allocation4 [shape = 's32[2]{0}', space=sflag, size = 0x8, scoped, tag = 'scoped memory for cat_attention_forward.1']
    %9 = vsyncpa [#allocation4], 0
    %s10 = scalar_lea.sflag [#allocation4], 1
    %11 = vsyncpa %s10, 0
    loop: start=0, step=1, limit=4
    $region2: #{cat_attention_forward.1} parent=1 // loop_pre_header
      _
    $region3: #{cat_attention_forward.1} parent=1 // loop_header
      %s13 = sphi 0, %s17
      %p14 = scmp.ge.s32.totalorder %s13, 4
      %s23 = sphi 0, %s25
      %s26 = sphi 0, %s23
      %s27 = sphi 0, %s26
      %s43 = sphi 0, %s27
      %s47 = sphi 0, %s47
      %s49 = sphi 0, %s47
      %s50 = sphi 0, %s49
      %s64 = sphi 0, %s50
      %s68 = sphi 0, %s68
      %s70 = sphi 0, %s68
      %s71 = sphi 0, %s70
      %s85 = sphi 0, %s71
      %s89 = sphi 0, %s89
      %s91 = sphi 0, %s89
      %s92 = sphi 0, %s91
      %s106 = sphi 0, %s92
      %s112 = sphi 0, %s114
      %s115 = sphi 0, %s112
      %s116 = sphi 0, %s115
      %s132 = sphi 0, %s116
    $region4: #{cat_attention_forward.1} parent=1 // loop_header_branch
      %16 = sbr.rel (%p14) target = $region8
    $region5: #{cat_attention_forward.1} parent=1 // loop_body
      %s18 = ssub.s32 %s13, 1
      %s19 = ssub.s32 %s13, 2
      %s20 = sadd.s32 %s13, 1
      %s21 = ssub.s32 %s13, %s20
      %p22 = scmp.eq.s32.totalorder %s21, 0
      %s24 = sadd.s32 %s23, 1
      %s25 = scalar_select %p22, %s23, %s24
      %p28 = pneg %p22
      %p29 = scmp.eq.s32.totalorder %s13, 1
      %p30 = por %p28, %p29
      %p31 = scmp.ne.s32.totalorder %s23, %s26
      %p32 = scmp.eq.s32.totalorder %s13, 0
      %p33 = por %p31, %p32
      %p34 = scmp.ne.s32.totalorder %s23, %s26
      %p35 = scmp.eq.s32.totalorder %s18, 1
      %p36 = por %p34, %p35
      %p37 = scmp.ne.s32.totalorder %s26, %s27
      %p38 = scmp.eq.s32.totalorder %s18, 0
      %p39 = por %p37, %p38
      %p40 = scmp.ne.s32.totalorder %s26, %s27
      %p41 = scmp.eq.s32.totalorder %s19, 1
      %p42 = por %p40, %p41
      %p44 = scmp.ne.s32.totalorder %s27, %s43
      %p45 = scmp.eq.s32.totalorder %s19, 0
      %p46 = por %p44, %p45
      %s48 = sadd.s32 %s47, 1
      %p51 = scmp.eq.s32.totalorder %s13, 1
      %p52 = scmp.ne.s32.totalorder %s47, %s49
      %p53 = scmp.eq.s32.totalorder %s13, 0
      %p54 = por %p52, %p53
      %p55 = scmp.ne.s32.totalorder %s47, %s49
      %p56 = scmp.eq.s32.totalorder %s18, 1
      %p57 = por %p55, %p56
      %p58 = scmp.ne.s32.totalorder %s49, %s50
      %p59 = scmp.eq.s32.totalorder %s18, 0
      %p60 = por %p58, %p59
      %p61 = scmp.ne.s32.totalorder %s49, %s50
      %p62 = scmp.eq.s32.totalorder %s19, 1
      %p63 = por %p61, %p62
      %p65 = scmp.ne.s32.totalorder %s50, %s64
      %p66 = scmp.eq.s32.totalorder %s19, 0
      %p67 = por %p65, %p66
      %s69 = sadd.s32 %s68, 1
      %p72 = scmp.eq.s32.totalorder %s13, 1
      %p73 = scmp.ne.s32.totalorder %s68, %s70
      %p74 = scmp.eq.s32.totalorder %s13, 0
      %p75 = por %p73, %p74
      %p76 = scmp.ne.s32.totalorder %s68, %s70
      %p77 = scmp.eq.s32.totalorder %s18, 1
      %p78 = por %p76, %p77
      %p79 = scmp.ne.s32.totalorder %s70, %s71
      %p80 = scmp.eq.s32.totalorder %s18, 0
      %p81 = por %p79, %p80
      %p82 = scmp.ne.s32.totalorder %s70, %s71
      %p83 = scmp.eq.s32.totalorder %s19, 1
      %p84 = por %p82, %p83
      %p86 = scmp.ne.s32.totalorder %s71, %s85
      %p87 = scmp.eq.s32.totalorder %s19, 0
      %p88 = por %p86, %p87
      %s90 = sadd.s32 %s89, 1
      %p93 = scmp.eq.s32.totalorder %s13, 1
      %p94 = scmp.ne.s32.totalorder %s89, %s91
      %p95 = scmp.eq.s32.totalorder %s13, 0
      %p96 = por %p94, %p95
      %p97 = scmp.ne.s32.totalorder %s89, %s91
      %p98 = scmp.eq.s32.totalorder %s18, 1
      %p99 = por %p97, %p98
      %p100 = scmp.ne.s32.totalorder %s91, %s92
      %p101 = scmp.eq.s32.totalorder %s18, 0
      %p102 = por %p100, %p101
      %p103 = scmp.ne.s32.totalorder %s91, %s92
      %p104 = scmp.eq.s32.totalorder %s19, 1
      %p105 = por %p103, %p104
      %p107 = scmp.ne.s32.totalorder %s92, %s106
      %p108 = scmp.eq.s32.totalorder %s19, 0
      %p109 = por %p107, %p108
      %s110 = ssub.s32 %s13, %s20
      %p111 = scmp.eq.s32.totalorder %s110, 0
      %s113 = sadd.s32 %s112, 1
      %s114 = scalar_select %p111, %s112, %s113
      %p117 = pneg %p111
      %p118 = scmp.eq.s32.totalorder %s13, 1
      %p119 = por %p117, %p118
      %p120 = scmp.ne.s32.totalorder %s112, %s115
      %p121 = scmp.eq.s32.totalorder %s13, 0
      %p122 = por %p120, %p121
      %p123 = scmp.ne.s32.totalorder %s112, %s115
      %p124 = scmp.eq.s32.totalorder %s18, 1
      %p125 = por %p123, %p124
      %p126 = scmp.ne.s32.totalorder %s115, %s116
      %p127 = scmp.eq.s32.totalorder %s18, 0
      %p128 = por %p126, %p127
      %p129 = scmp.ne.s32.totalorder %s115, %s116
      %p130 = scmp.eq.s32.totalorder %s19, 1
      %p131 = por %p129, %p130
      %p133 = scmp.ne.s32.totalorder %s116, %s132
      %p134 = scmp.eq.s32.totalorder %s19, 0
      %p135 = por %p133, %p134
      %p136 = scmp.le.s32.totalorder 1, %s13
      %p137 = scmp.lt.s32.totalorder %s13, 3
      %p138 = pnand %p136, %p137
      %p139 = pneg %p138
      // Predicated region
      $region9: #{cat_attention_forward.1} parent=5 // pred_check
        _
      $region10: #{cat_attention_forward.1} parent=5 // pred_check_branch
        %141 = sbr.rel (%p138) target = $region12
      $region11: #{cat_attention_forward.1} parent=5 // pred_region
        %s142 = ssub.s32 %s13, 1
        // Predicated region
        $region13: #{cat_attention_forward.1} parent=11 // pred_check
          %p143 = pneg %p60
        $region14: #{cat_attention_forward.1} parent=11 // pred_check_branch
          %145 = sbr.rel (%p143) target = $region16
        $region15: #{cat_attention_forward.1} parent=11 // pred_region
          _
        $region16: #{cat_attention_forward.1} parent=11 // pred_fallthru
          _
        // Predicated region
        $region17: #{cat_attention_forward.1} parent=11 // pred_check
          %p146 = pneg %p81
        $region18: #{cat_attention_forward.1} parent=11 // pred_check_branch
          %148 = sbr.rel (%p146) target = $region20
        $region19: #{cat_attention_forward.1} parent=11 // pred_region
          _
        $region20: #{cat_attention_forward.1} parent=11 // pred_fallthru
          _
        // Predicated region
        $region21: #{cat_attention_forward.1} parent=11 // pred_check
          %p149 = pneg %p102
        $region22: #{cat_attention_forward.1} parent=11 // pred_check_branch
          %151 = sbr.rel (%p149) target = $region24
        $region23: #{cat_attention_forward.1} parent=11 // pred_region
          _
        $region24: #{cat_attention_forward.1} parent=11 // pred_fallthru
          _
      $region12: #{cat_attention_forward.1} parent=5 // pred_fallthru
        _
      %p152 = scmp.lt.s32.totalorder %s13, 2
      // Predicated region
      $region25: #{cat_attention_forward.1} parent=5 // pred_check
        %p153 = pneg %p152
      $region26: #{cat_attention_forward.1} parent=5 // pred_check_branch
        %155 = sbr.rel (%p153) target = $region28
      $region27: #{cat_attention_forward.1} parent=5 // pred_region
        // Predicated region
        $region29: #{cat_attention_forward.1} parent=27 // pred_check
          %p156 = pneg %p33
        $region30: #{cat_attention_forward.1} parent=27 // pred_check_branch
          %158 = sbr.rel (%p156) target = $region32
        $region31: #{cat_attention_forward.1} parent=27 // pred_region
          %p159 = scmp.lt.s32.totalorder %s13, 1
          %s160 = scalar_select %p159, %s13, 1
          %s161 = smul.addr %s160, 8
          %s162 = scalar_lea.vmem %s0, %s161
        $region32: #{cat_attention_forward.1} parent=27 // pred_fallthru
          _
      $region28: #{cat_attention_forward.1} parent=5 // pred_fallthru
        _
      %p163 = scmp.le.s32.totalorder 1, %s13
      %p164 = scmp.lt.s32.totalorder %s13, 3
      %p165 = pnand %p163, %p164
      %p166 = pneg %p165
      // Predicated region
      $region33: #{cat_attention_forward.1} parent=5 // pred_check
        _
      $region34: #{cat_attention_forward.1} parent=5 // pred_check_branch
        %168 = sbr.rel (%p165) target = $region36
      $region35: #{cat_attention_forward.1} parent=5 // pred_region
        %s169 = ssub.s32 %s13, 1
        %p170 = scmp.lt.s32.totalorder %s18, 1
        %s171 = scalar_select %p170, %s18, 1
        %s172 = smul.addr %s171, 8
        %s173 = scalar_lea.vmem %s0, %s172
        %p174 = pneg %p39
        %p175 = pneg %p36
        %p176 = pneg %p60
        %p177 = pneg %p57
        %p178 = pneg %p81
        %p179 = pneg %p78
        %p180 = pneg %p102
        %p181 = pneg %p99
        %p182 = pneg %p128
        %p183 = pneg %p125
        %s184 = sand.u32 %s115, 1
        %s185 = scalar_lea.sflag [#allocation4], %s184
        %s186 = sand.u32 %s115, 1
        %s187 = smul.addr %s186, 8
        %s188 = scalar_lea.vmem [#allocation3], %s187
        %p189 = scmp.lt.s32.totalorder %s18, 1
        %s190 = scalar_select %p189, %s18, 1
        %s191 = smul.addr %s190, 8
        %s192 = scalar_lea.vmem %s0, %s191
        %v194 = vld [vmem:[%s192] sm:$0xff]
        %v195 = vpack.c.bf16 %v194, %v194
        %v196 = vld [vmem:[%s1] sm:$0xff]
        %v197 = vld [vmem:[%s1 + $0x8] sm:$0xff]
        %v198 = vld [vmem:[%s1 + $0x10] sm:$0xff]
        %v199 = vld [vmem:[%s1 + $0x18] sm:$0xff]
        %v204 = vunpack.c.l.b16 %v196
        %v205 = vunpack.c.h.b16 %v196
        %v206 = vunpack.c.l.b16 %v197
        %v207 = vunpack.c.h.b16 %v197
        %v208 = vunpack.c.l.b16 %v198
        %v209 = vunpack.c.h.b16 %v198
        %v210 = vunpack.c.l.b16 %v199
        %v211 = vunpack.c.h.b16 %v199
        %v212 = vpack.c.b16 %v206, %v204
        %v213 = vpack.c.b16 %v207, %v205
        %v214 = vpack.c.b16 %v210, %v208
        %v215 = vpack.c.b16 %v211, %v209
        %vm220 = vcmask 261120
        %v222 = vsel %vm220, %v195, 0
        %224 = vmatpush.bf16.msra.mxu0 0
        %225 = vmatpush.bf16.msra.mxu0 0
        %226 = vmatpush.bf16.msra.mxu0 0
        %227 = vmatpush.bf16.msra.mxu0 0
        %228 = vmatpush.bf16.msra.mxu0 0
        %229 = vmatpush.bf16.msra.mxu0 0
        %230 = vmatpush.bf16.msra.mxu0 %v214
        %231 = vmatpush.bf16.msra.mxu0 %v212
        %232 = vmatmul.bf16.gmra.mxu0 %v222
        %v233 = vpop.f32.mrf.mxu0
        %v234 = vadd.f32 0.0, %v233
        %v235 = vpop.f32.mrf.mxu0
        %236 = vdwg.mxu0
        %237 = vmatpush.bf16.msra.mxu0 0
        %238 = vmatpush.bf16.msra.mxu0 0
        %239 = vmatpush.bf16.msra.mxu0 0
        %240 = vmatpush.bf16.msra.mxu0 0
        %241 = vmatpush.bf16.msra.mxu0 0
        %242 = vmatpush.bf16.msra.mxu0 0
        %243 = vmatpush.bf16.msra.mxu0 %v215
        %244 = vmatpush.bf16.msra.mxu0 %v213
        %245 = vmatmul.bf16.gmra.mxu0 %v222
        %v246 = vpop.f32.mrf.mxu0
        %v247 = vadd.f32 0.0, %v246
        %v248 = vpop.f32.mrf.mxu0
        %249 = vdwg.mxu0
        %v250 = vpack.c.bf16 %v247, %v234
        %v252 = vunpack.c.l.b16 %v250
        %v253 = vpack.c.b16 %v252, %v252
        %254 = vrot.lane.b32.xlu0 %v253, 64
        %v255 = vpop.permute.xlu0 %254
        %vm256 = vcmask 130048
        %v258 = vsel %vm256, %v250, 0
        %v261 = vsel %vm256, %v255, 0
        %263 = vmatpush.bf16.xpose.msra.mxu0 0
        %264 = vmatpush.bf16.xpose.msra.mxu0 0
        %265 = vmatpush.bf16.xpose.msra.mxu0 0
        %266 = vmatpush.bf16.xpose.msra.mxu0 0
        %267 = vmatpush.bf16.xpose.msra.mxu0 0
        %268 = vmatpush.bf16.xpose.msra.mxu0 0
        %269 = vmatpush.bf16.xpose.msra.mxu0 0
        %270 = vmatpush.bf16.xpose.msra.mxu0 %v261
        %271 = vmatmul.bf16.gmra.mxu0 %v258
        %v272 = vpop.f32.mrf.mxu0
        %v273 = vadd.f32 0.0, %v272
        %v274 = vpop.f32.mrf.mxu0
        %275 = vdwg.mxu0
        %vm276 = vcmask 64512
        %v277 = vsel %vm276, %v273, -inf
        %278 = vmax.xlane.f32.xlu0 %v277
        %v279 = vpop.xlane.xlu0 %278
        %v280 = vsub.f32 %v273, %v279
        %v281 = vmul.f32 %v280, 1.442695
        %v282 = vpow.pop %v281
        %v283 = vsel %vm276, %v282, 0.0
        %284 = vadd.xlane.f32.xlu0 %v283
        %v285 = vpop.xlane.xlu0 %284
        %v286 = vrcp.pop %v285
        %v287 = vmul.f32 %v282, %v286
        %v288 = vpack.c.bf16 %v287, %v287
        %v289 = vunpack.c.h.b16 %v250
        %v290 = vpack.c.b16 %v289, %v289
        %v292 = vsel %vm276, %v288, 0
        %vm294 = vcmask 1043456
        %v296 = vsel %vm294, %v290, 0
        %298 = vmatpush.bf16.msra.mxu0 0
        %299 = vmatpush.bf16.msra.mxu0 0
        %300 = vmatpush.bf16.msra.mxu0 0
        %301 = vmatpush.bf16.msra.mxu0 0
        %302 = vmatpush.bf16.msra.mxu0 0
        %303 = vmatpush.bf16.msra.mxu0 0
        %304 = vmatpush.bf16.msra.mxu0 0
        %305 = vmatpush.bf16.msra.mxu0 %v296
        %306 = vmatmul.bf16.gmra.mxu0 %v292
        %v307 = vpop.f32.mrf.mxu0
        %v308 = vadd.f32 0.0, %v307
        %v309 = vpop.f32.mrf.mxu0
        %310 = vdwg.mxu0
        %311 = vst.msk [vmem:[#allocation2] sm:$0xff] %vm256, %v308
        %312 = vrot.lane.b32.xlu0 %v253, 112
        %v313 = vpop.permute.xlu0 %312
        %314 = vrot.lane.b32.xlu0 %v253, 48
        %v315 = vpop.permute.xlu0 %314
        %v317 = vsel %vm256, %v313, 0
        %v320 = vsel %vm256, %v315, 0
        %322 = vmatpush.bf16.xpose.msra.mxu0 0
        %323 = vmatpush.bf16.xpose.msra.mxu0 0
        %324 = vmatpush.bf16.xpose.msra.mxu0 0
        %325 = vmatpush.bf16.xpose.msra.mxu0 0
        %326 = vmatpush.bf16.xpose.msra.mxu0 0
        %327 = vmatpush.bf16.xpose.msra.mxu0 0
        %328 = vmatpush.bf16.xpose.msra.mxu0 0
        %329 = vmatpush.bf16.xpose.msra.mxu0 %v320
        %330 = vmatmul.bf16.gmra.mxu0 %v317
        %v331 = vpop.f32.mrf.mxu0
        %v332 = vadd.f32 0.0, %v331
        %v333 = vpop.f32.mrf.mxu0
        %334 = vdwg.mxu0
        %v335 = vsel %vm276, %v332, -inf
        %336 = vmax.xlane.f32.xlu0 %v335
        %v337 = vpop.xlane.xlu0 %336
        %v338 = vsub.f32 %v332, %v337
        %v339 = vmul.f32 %v338, 1.442695
        %v340 = vpow.pop %v339
        %v341 = vsel %vm276, %v340, 0.0
        %342 = vadd.xlane.f32.xlu0 %v341
        %v343 = vpop.xlane.xlu0 %342
        %v344 = vrcp.pop %v343
        %v345 = vmul.f32 %v340, %v344
        %v346 = vpack.c.bf16 %v345, %v345
        %347 = vrot.lane.b32.xlu0 %v290, 112
        %v348 = vpop.permute.xlu0 %347
        %v350 = vsel %vm276, %v346, 0
        %v353 = vsel %vm294, %v348, 0
        %355 = vmatpush.bf16.msra.mxu0 0
        %356 = vmatpush.bf16.msra.mxu0 0
        %357 = vmatpush.bf16.msra.mxu0 0
        %358 = vmatpush.bf16.msra.mxu0 0
        %359 = vmatpush.bf16.msra.mxu0 0
        %360 = vmatpush.bf16.msra.mxu0 0
        %361 = vmatpush.bf16.msra.mxu0 0
        %362 = vmatpush.bf16.msra.mxu0 %v353
        %363 = vmatmul.bf16.gmra.mxu0 %v350
        %v364 = vpop.f32.mrf.mxu0
        %v365 = vadd.f32 0.0, %v364
        %v366 = vpop.f32.mrf.mxu0
        %367 = vdwg.mxu0
        %369 = vrot.lane.b32.xlu0 %v365, 16
        %v370 = vpop.permute.xlu0 %369
        %vm372 = vcmask 261248
        %373 = vst.msk [vmem:[#allocation2] sm:$0xff] %vm372, %v370
        %374 = vrot.lane.b32.xlu0 %v253, 96
        %v375 = vpop.permute.xlu0 %374
        %376 = vrot.lane.b32.xlu0 %v253, 32
        %v377 = vpop.permute.xlu0 %376
        %v379 = vsel %vm256, %v375, 0
        %v382 = vsel %vm256, %v377, 0
        %384 = vmatpush.bf16.xpose.msra.mxu0 0
        %385 = vmatpush.bf16.xpose.msra.mxu0 0
        %386 = vmatpush.bf16.xpose.msra.mxu0 0
        %387 = vmatpush.bf16.xpose.msra.mxu0 0
        %388 = vmatpush.bf16.xpose.msra.mxu0 0
        %389 = vmatpush.bf16.xpose.msra.mxu0 0
        %390 = vmatpush.bf16.xpose.msra.mxu0 0
        %391 = vmatpush.bf16.xpose.msra.mxu0 %v382
        %392 = vmatmul.bf16.gmra.mxu0 %v379
        %v393 = vpop.f32.mrf.mxu0
        %v394 = vadd.f32 0.0, %v393
        %v395 = vpop.f32.mrf.mxu0
        %396 = vdwg.mxu0
        %v397 = vsel %vm276, %v394, -inf
        %398 = vmax.xlane.f32.xlu0 %v397
        %v399 = vpop.xlane.xlu0 %398
        %v400 = vsub.f32 %v394, %v399
        %v401 = vmul.f32 %v400, 1.442695
        %v402 = vpow.pop %v401
        %v403 = vsel %vm276, %v402, 0.0
        %404 = vadd.xlane.f32.xlu0 %v403
        %v405 = vpop.xlane.xlu0 %404
        %v406 = vrcp.pop %v405
        %v407 = vmul.f32 %v402, %v406
        %v408 = vpack.c.bf16 %v407, %v407
        %409 = vrot.lane.b32.xlu0 %v290, 96
        %v410 = vpop.permute.xlu0 %409
        %v412 = vsel %vm276, %v408, 0
        %v415 = vsel %vm294, %v410, 0
        %417 = vmatpush.bf16.msra.mxu0 0
        %418 = vmatpush.bf16.msra.mxu0 0
        %419 = vmatpush.bf16.msra.mxu0 0
        %420 = vmatpush.bf16.msra.mxu0 0
        %421 = vmatpush.bf16.msra.mxu0 0
        %422 = vmatpush.bf16.msra.mxu0 0
        %423 = vmatpush.bf16.msra.mxu0 0
        %424 = vmatpush.bf16.msra.mxu0 %v415
        %425 = vmatmul.bf16.gmra.mxu0 %v412
        %v426 = vpop.f32.mrf.mxu0
        %v427 = vadd.f32 0.0, %v426
        %v428 = vpop.f32.mrf.mxu0
        %429 = vdwg.mxu0
        %431 = vrot.lane.b32.xlu0 %v427, 32
        %v432 = vpop.permute.xlu0 %431
        %vm434 = vcmask 392448
        %435 = vst.msk [vmem:[#allocation2] sm:$0xff] %vm434, %v432
        %436 = vrot.lane.b32.xlu0 %v253, 80
        %v437 = vpop.permute.xlu0 %436
        %438 = vrot.lane.b32.xlu0 %v253, 16
        %v439 = vpop.permute.xlu0 %438
        %v441 = vsel %vm256, %v437, 0
        %v444 = vsel %vm256, %v439, 0
        %446 = vmatpush.bf16.xpose.msra.mxu0 0
        %447 = vmatpush.bf16.xpose.msra.mxu0 0
        %448 = vmatpush.bf16.xpose.msra.mxu0 0
        %449 = vmatpush.bf16.xpose.msra.mxu0 0
        %450 = vmatpush.bf16.xpose.msra.mxu0 0
        %451 = vmatpush.bf16.xpose.msra.mxu0 0
        %452 = vmatpush.bf16.xpose.msra.mxu0 0
        %453 = vmatpush.bf16.xpose.msra.mxu0 %v444
        %454 = vmatmul.bf16.gmra.mxu0 %v441
        %v455 = vpop.f32.mrf.mxu0
        %v456 = vadd.f32 0.0, %v455
        %v457 = vpop.f32.mrf.mxu0
        %458 = vdwg.mxu0
        %v459 = vsel %vm276, %v456, -inf
        %460 = vmax.xlane.f32.xlu0 %v459
        %v461 = vpop.xlane.xlu0 %460
        %v462 = vsub.f32 %v456, %v461
        %v463 = vmul.f32 %v462, 1.442695
        %v464 = vpow.pop %v463
        %v465 = vsel %vm276, %v464, 0.0
        %466 = vadd.xlane.f32.xlu0 %v465
        %v467 = vpop.xlane.xlu0 %466
        %v468 = vrcp.pop %v467
        %v469 = vmul.f32 %v464, %v468
        %v470 = vpack.c.bf16 %v469, %v469
        %471 = vrot.lane.b32.xlu0 %v290, 80
        %v472 = vpop.permute.xlu0 %471
        %v474 = vsel %vm276, %v470, 0
        %v477 = vsel %vm294, %v472, 0
        %479 = vmatpush.bf16.msra.mxu0 0
        %480 = vmatpush.bf16.msra.mxu0 0
        %481 = vmatpush.bf16.msra.mxu0 0
        %482 = vmatpush.bf16.msra.mxu0 0
        %483 = vmatpush.bf16.msra.mxu0 0
        %484 = vmatpush.bf16.msra.mxu0 0
        %485 = vmatpush.bf16.msra.mxu0 0
        %486 = vmatpush.bf16.msra.mxu0 %v477
        %487 = vmatmul.bf16.gmra.mxu0 %v474
        %v488 = vpop.f32.mrf.mxu0
        %v489 = vadd.f32 0.0, %v488
        %v490 = vpop.f32.mrf.mxu0
        %491 = vdwg.mxu0
        %493 = vrot.lane.b32.xlu0 %v489, 48
        %v494 = vpop.permute.xlu0 %493
        %vm496 = vcmask 523648
        %497 = vst.msk [vmem:[#allocation2] sm:$0xff] %vm496, %v494
        %v498 = vld [vmem:[#allocation2] sm:$0xff]
        %v499 = vpack.c.bf16 %v498, %v498
        %v500 = vld [vmem:[%s2] sm:$0xf]
        %v501 = vld [vmem:[%s2 + $0x4] sm:$0xf]
        %v502 = vld [vmem:[%s2 + $0x8] sm:$0xf]
        %v503 = vld [vmem:[%s2 + $0xc] sm:$0xf]
        %v504 = vld [vmem:[%s2 + $0x10] sm:$0xf]
        %v505 = vld [vmem:[%s2 + $0x14] sm:$0xf]
        %v506 = vld [vmem:[%s2 + $0x18] sm:$0xf]
        %v507 = vld [vmem:[%s2 + $0x1c] sm:$0xf]
        %v508 = vld [vmem:[%s3] sm:$0x1]
        %v510 = vperm.slane %v508, 0
        %v520 = vunpack.c.l.b16 %v500
        %v521 = vunpack.c.l.b16 %v501
        %v522 = vunpack.c.l.b16 %v502
        %v523 = vunpack.c.l.b16 %v503
        %v524 = vunpack.c.l.b16 %v504
        %v525 = vunpack.c.l.b16 %v505
        %v526 = vunpack.c.l.b16 %v506
        %v527 = vunpack.c.l.b16 %v507
        %v528 = vpack.c.b16 %v521, %v520
        %v529 = vpack.c.b16 %v523, %v522
        %v530 = vpack.c.b16 %v525, %v524
        %v531 = vpack.c.b16 %v527, %v526
        %vm536 = vcmask 523264
        %v538 = vsel %vm536, %v499, 0
        %540 = vmatpush.bf16.msra.mxu0 0
        %541 = vmatpush.bf16.msra.mxu0 0
        %542 = vmatpush.bf16.msra.mxu0 0
        %543 = vmatpush.bf16.msra.mxu0 0
        %544 = vmatpush.bf16.msra.mxu0 %v531
        %545 = vmatpush.bf16.msra.mxu0 %v530
        %546 = vmatpush.bf16.msra.mxu0 %v529
        %547 = vmatpush.bf16.msra.mxu0 %v528
        %548 = vmatmul.bf16.gmra.mxu0 %v538
        %v549 = vpop.f32.mrf.mxu0
        %v550 = vadd.f32 %v510, %v549
        %v551 = vpop.f32.mrf.mxu0
        %552 = vdwg.mxu0
        %553 = vst.msk [vmem:[%s188] sm:$0xff] %vm220, %v550
        %s554 = sand.u32 %s115, 1
        %s555 = scalar_lea.sflag [#allocation4], %s554
        %s556 = sand.u32 %s115, 1
        %s557 = smul.addr %s556, 8
        %s558 = scalar_lea.vmem [#allocation3], %s557
        // Predicated region
        $region37: #{cat_attention_forward.1} parent=35 // pred_check
          %p559 = pneg %p125
        $region38: #{cat_attention_forward.1} parent=35 // pred_check_branch
          %561 = sbr.rel (%p559) target = $region40
        $region39: #{cat_attention_forward.1} parent=35 // pred_region
          %563 = vsyncadd %s555, 0
          %s564 = smul.addr %s18, 8
          %s565 = scalar_lea.hbm %s4, %s564
          %s567 = sshll.u32 %s558, 4
          %s568 = int_to_ptr.vmem [resolvable:$true] %s567
          %s569 = sshll.u32 %s565, 4
          %s570 = int_to_ptr.hbm [resolvable:$true] %s569
          %572 = dma.vmem_to_hbm [thread:$0]  %s568, 128, %s570, %s555
        $region40: #{cat_attention_forward.1} parent=35 // pred_fallthru
          _
      $region36: #{cat_attention_forward.1} parent=5 // pred_fallthru
        _
      %p573 = scmp.le.s32.totalorder 2, %s13
      // Predicated region
      $region41: #{cat_attention_forward.1} parent=5 // pred_check
        %p574 = pneg %p573
      $region42: #{cat_attention_forward.1} parent=5 // pred_check_branch
        %576 = sbr.rel (%p574) target = $region44
      $region43: #{cat_attention_forward.1} parent=5 // pred_region
        %s577 = ssub.s32 %s13, 2
        // Predicated region
        $region45: #{cat_attention_forward.1} parent=43 // pred_check
          %p578 = pneg %p131
        $region46: #{cat_attention_forward.1} parent=43 // pred_check_branch
          %580 = sbr.rel (%p578) target = $region48
        $region47: #{cat_attention_forward.1} parent=43 // pred_region
          %s581 = sand.u32 %s116, 1
          %s582 = scalar_lea.sflag [#allocation4], %s581
          %s583 = sand.u32 %s116, 1
          %s584 = smul.addr %s583, 8
          %s585 = scalar_lea.vmem [#allocation3], %s584
          %587 = dma.done %s582, 128
        $region48: #{cat_attention_forward.1} parent=43 // pred_fallthru
          _
      $region44: #{cat_attention_forward.1} parent=5 // pred_fallthru
        _
    $region6: #{cat_attention_forward.1} parent=1 // loop_footer
      %s17 = sadd.s32 1, %s13
    $region7: #{cat_attention_forward.1} parent=1 // loop_footer_branch
      %12 = sbr.rel target = $region3
    $region8: #{cat_attention_forward.1} parent=1 // loop_exit
      _
    %588 = vsyncpa [#allocation4], 1
    %s589 = scalar_lea.sflag [#allocation4], 1
    %590 = vsyncpa %s589, 1

</llo_original>
